<compile_context>
chip_gen: v7x
topology: tpu7x:2x2x1
jax: 0.10.0
libtpu: 0.0.40
codegen_flags: <defaults>
</compile_context>

<pallas_src>
import numpy as np
import jax
import jax.numpy as jnp
from jax.experimental import pallas as pl
from jax.experimental.pallas import tpu as pltpu

# ----------------------------- configuration --------------------------------
IN_DIM = 32      # input_dim  (news-vector dim)
HID_DIM = 128    # hidden_dim (lane-dense intermediate)
OUT_DIM = 5      # output_dim (num sentiment classes)
OUT_PAD = 128    # lane-padded output width used inside the kernel
B = 2            # users in the batch
HIST = 4         # clicked news per user
CAND = 3         # candidate news per user


def _round_up(n, m):
    return -(-n // m) * m


# =============================== kernel ======================================
def _discriminator_kernel(x_ref, w1_ref, b1_ref, w2_ref, b2_ref, o_ref):
    """Fused 2-layer MLP: tanh(x @ W1 + b1) @ W2 + b2, all rows in one step."""
    h = jnp.tanh(
        jnp.dot(x_ref[...], w1_ref[...], preferred_element_type=jnp.float32)
        + b1_ref[...])                                        # (N_pad, HID_DIM)
    o_ref[...] = (
        jnp.dot(h, w2_ref[...], preferred_element_type=jnp.float32)
        + b2_ref[...]).astype(o_ref.dtype)                    # (N_pad, OUT_PAD)


def _mlp(x, w1, b1, w2p, b2p):
    N, Din = x.shape
    Dh = w1.shape[1]
    Dout = w2p.shape[1]
    return pl.pallas_call(
        _discriminator_kernel,
        out_shape=jax.ShapeDtypeStruct((N, Dout), jnp.float32),
        grid=(1,),
        in_specs=[
            pl.BlockSpec((N, Din), lambda i: (0, 0)),
            pl.BlockSpec((Din, Dh), lambda i: (0, 0)),
            pl.BlockSpec((1, Dh), lambda i: (0, 0)),
            pl.BlockSpec((Dh, Dout), lambda i: (0, 0)),
            pl.BlockSpec((1, Dout), lambda i: (0, 0)),
        ],
        out_specs=pl.BlockSpec((N, Dout), lambda i: (0, 0)),
        compiler_params=pltpu.CompilerParams(
            dimension_semantics=("arbitrary",)),
    )(x, w1, b1, w2p, b2p)


# ============================ module wrapper =================================
@jax.jit
def discriminator_forward(params, clicked_news_vector, candidate_news_vector):
    """Equivalent of Discriminator.forward.

    Returns (predicted_clicked_senti, predicted_candidate_senti).
    Both inputs go through ONE fused pallas_call (concat rows -> pad rows to a
    sublane multiple -> MLP with lane-padded output -> slice/split).
    """
    n_clicked = clicked_news_vector.shape[0]
    x = jnp.concatenate([clicked_news_vector, candidate_news_vector], axis=0)
    n_rows = x.shape[0]
    n_pad = _round_up(n_rows, 8)
    if n_pad != n_rows:
        x = jnp.pad(x, ((0, n_pad - n_rows), (0, 0)))
    out = _mlp(x, params['w1'], params['b1'], params['w2_p'], params['b2_p'])
    out = out[:n_rows, :OUT_DIM]
    return out[:n_clicked], out[n_clicked:]


def init_params(key):
    k1, k2, k3, k4 = jax.random.split(key, 4)
    s1 = 1.0 / np.sqrt(IN_DIM)
    s2 = 1.0 / np.sqrt(HID_DIM)
    w1 = (s1 * jax.random.normal(k1, (IN_DIM, HID_DIM))).astype(jnp.float32)
    b1 = (s1 * jax.random.normal(k2, (1, HID_DIM))).astype(jnp.float32)
    w2 = (s2 * jax.random.normal(k3, (HID_DIM, OUT_DIM))).astype(jnp.float32)
    b2 = (s2 * jax.random.normal(k4, (1, OUT_DIM))).astype(jnp.float32)
    # Lane-padded copies used by the kernel (zero columns -> identical outputs
    # on the first OUT_DIM lanes; padded lanes are sliced away).
    w2_p = jnp.zeros((HID_DIM, OUT_PAD), jnp.float32).at[:, :OUT_DIM].set(w2)
    b2_p = jnp.zeros((1, OUT_PAD), jnp.float32).at[:, :OUT_DIM].set(b2)
    return dict(w1=w1, b1=b1, w2=w2, b2=b2, w2_p=w2_p, b2_p=b2_p)


# ================================= main ======================================
if __name__ == "__main__":
    key = jax.random.PRNGKey(0)
    kp, kc, kv = jax.random.split(key, 3)

    params = init_params(kp)
    clicked_news_vector = jax.random.normal(kc, (B * HIST, IN_DIM), jnp.float32)
    candidate_news_vector = jax.random.normal(kv, (B * CAND, IN_DIM), jnp.float32)

    pred_clicked, pred_candidate = jax.block_until_ready(
        discriminator_forward(params, clicked_news_vector, candidate_news_vector))

    assert pred_clicked.shape == (B * HIST, OUT_DIM)
    assert pred_candidate.shape == (B * CAND, OUT_DIM)

    # pure-JAX reference check (correctness gate before claiming success)
    def ref(x):
        return jnp.tanh(x @ params['w1'] + params['b1']) @ params['w2'] + params['b2']

    np.testing.assert_allclose(np.asarray(pred_clicked),
                               np.asarray(ref(clicked_news_vector)),
                               rtol=1e-5, atol=1e-5)
    np.testing.assert_allclose(np.asarray(pred_candidate),
                               np.asarray(ref(candidate_news_vector)),
                               rtol=1e-5, atol=1e-5)
    print("KERNEL_OK")
</pallas_src>

<mosaic_0001>
module attributes {stable_mosaic.version = 11 : i64} {
  func.func @_discriminator_kernel(%arg0: i32, %arg1: memref<16x32xf32, #tpu.memory_space<vmem>>, %arg2: memref<32x128xf32, #tpu.memory_space<vmem>>, %arg3: memref<1x128xf32, #tpu.memory_space<vmem>>, %arg4: memref<128x128xf32, #tpu.memory_space<vmem>>, %arg5: memref<1x128xf32, #tpu.memory_space<vmem>>, %arg6: memref<16x128xf32, #tpu.memory_space<vmem>>) attributes {dimension_semantics = [#tpu.dimension_semantics<arbitrary>], iteration_bounds = array<i64: 1>, scalar_prefetch = 0 : i64, scratch_operands = 0 : i64, tpu.core_type = #tpu.core_type<tc>, window_params = [{pipeline_mode = #tpu.pipeline_mode<synchronous>, transform_indices = @transform_0, window_bounds = array<i64: 16, 32>}, {pipeline_mode = #tpu.pipeline_mode<synchronous>, transform_indices = @transform_1, window_bounds = array<i64: 32, 128>}, {pipeline_mode = #tpu.pipeline_mode<synchronous>, transform_indices = @transform_2, window_bounds = array<i64: 1, 128>}, {pipeline_mode = #tpu.pipeline_mode<synchronous>, transform_indices = @transform_3, window_bounds = array<i64: 128, 128>}, {pipeline_mode = #tpu.pipeline_mode<synchronous>, transform_indices = @transform_4, window_bounds = array<i64: 1, 128>}, {pipeline_mode = #tpu.pipeline_mode<synchronous>, transform_indices = @transform_5, window_bounds = array<i64: 16, 128>}]} {
    %c0 = arith.constant 0 : index
    %c0_0 = arith.constant 0 : index
    %0 = vector.load %arg1[%c0, %c0_0] : memref<16x32xf32, #tpu.memory_space<vmem>>, vector<16x32xf32>
    %c0_1 = arith.constant 0 : index
    %c0_2 = arith.constant 0 : index
    %1 = vector.load %arg2[%c0_1, %c0_2] : memref<32x128xf32, #tpu.memory_space<vmem>>, vector<32x128xf32>
    %cst = arith.constant dense<0.000000e+00> : vector<16x128xf32>
    %2 = tpu.matmul %0, %1, %cst {dimension_numbers = #tpu.dot_dimension_numbers<[1], [0], [0], [1], [0, 0, 1, 1], [], []>} : vector<16x32xf32>, vector<32x128xf32>, vector<16x128xf32> -> vector<16x128xf32>
    %c0_3 = arith.constant 0 : index
    %c0_4 = arith.constant 0 : index
    %3 = vector.load %arg3[%c0_3, %c0_4] : memref<1x128xf32, #tpu.memory_space<vmem>>, vector<1x128xf32>
    %4 = vector.broadcast %3 : vector<1x128xf32> to vector<16x128xf32>
    %5 = arith.addf %2, %4 : vector<16x128xf32>
    %6 = math.tanh %5 : vector<16x128xf32>
    %c0_5 = arith.constant 0 : index
    %c0_6 = arith.constant 0 : index
    %7 = vector.load %arg4[%c0_5, %c0_6] : memref<128x128xf32, #tpu.memory_space<vmem>>, vector<128x128xf32>
    %cst_7 = arith.constant dense<0.000000e+00> : vector<16x128xf32>
    %8 = tpu.matmul %6, %7, %cst_7 {dimension_numbers = #tpu.dot_dimension_numbers<[1], [0], [0], [1], [0, 0, 1, 1], [], []>} : vector<16x128xf32>, vector<128x128xf32>, vector<16x128xf32> -> vector<16x128xf32>
    %c0_8 = arith.constant 0 : index
    %c0_9 = arith.constant 0 : index
    %9 = vector.load %arg5[%c0_8, %c0_9] : memref<1x128xf32, #tpu.memory_space<vmem>>, vector<1x128xf32>
    %10 = vector.broadcast %9 : vector<1x128xf32> to vector<16x128xf32>
    %11 = arith.addf %8, %10 : vector<16x128xf32>
    %c0_10 = arith.constant 0 : index
    %c0_11 = arith.constant 0 : index
    %12 = vector.load %arg6[%c0_10, %c0_11] : memref<16x128xf32, #tpu.memory_space<vmem>>, vector<16x128xf32>
    tpu.vector_store %arg6[%c0_10, %c0_11], %11 {strides = array<i32>} : memref<16x128xf32, #tpu.memory_space<vmem>>, vector<16x128xf32>,
    return
  }
  func.func @transform_0(%arg0: i32) -> (i32, i32) {
    %c0_i32 = arith.constant 0 : i32
    %c0_i32_0 = arith.constant 0 : i32
    %c0_i32_1 = arith.constant 0 : i32
    return %c0_i32, %c0_i32_0 : i32, i32
  }
  func.func @transform_1(%arg0: i32) -> (i32, i32) {
    %c0_i32 = arith.constant 0 : i32
    %c0_i32_0 = arith.constant 0 : i32
    %c0_i32_1 = arith.constant 0 : i32
    return %c0_i32, %c0_i32_0 : i32, i32
  }
  func.func @transform_2(%arg0: i32) -> (i32, i32) {
    %c0_i32 = arith.constant 0 : i32
    %c0_i32_0 = arith.constant 0 : i32
    %c0_i32_1 = arith.constant 0 : i32
    return %c0_i32, %c0_i32_0 : i32, i32
  }
  func.func @transform_3(%arg0: i32) -> (i32, i32) {
    %c0_i32 = arith.constant 0 : i32
    %c0_i32_0 = arith.constant 0 : i32
    %c0_i32_1 = arith.constant 0 : i32
    return %c0_i32, %c0_i32_0 : i32, i32
  }
  func.func @transform_4(%arg0: i32) -> (i32, i32) {
    %c0_i32 = arith.constant 0 : i32
    %c0_i32_0 = arith.constant 0 : i32
    %c0_i32_1 = arith.constant 0 : i32
    return %c0_i32, %c0_i32_0 : i32, i32
  }
  func.func @transform_5(%arg0: i32) -> (i32, i32) {
    %c0_i32 = arith.constant 0 : i32
    %c0_i32_0 = arith.constant 0 : i32
    %c0_i32_1 = arith.constant 0 : i32
    return %c0_i32, %c0_i32_0 : i32, i32
  }
}

</mosaic_0001>

<llo_original>
// kernel: discriminator_forward.1
$region0: #{discriminator_forward.1}
  #allocation0 [shape = 'u32[]', space=smem, size = 0x4, offset = 0x4, fixed_abs, tag = 'smem constant byte address 0x4 - core index']
  #allocation1 [shape = 'u32[144,128]{1,0:T(1,128)}', space=vmem, size = 0x12000, scoped, tag = 'internal scratch']
  %s0 = inlined_call_operand.vmem [shape: f32[16,32], index: 0, kind: input, shape index: {}]
  %s1 = inlined_call_operand.vmem [shape: f32[32,128], index: 1, kind: input, shape index: {}]
  %s2 = inlined_call_operand.vmem [shape: f32[1,128], index: 2, kind: input, shape index: {}]
  %s3 = inlined_call_operand.hbm [shape: f32[128,128], index: 3, kind: input, shape index: {}]
  %s4 = inlined_call_operand.vmem [shape: f32[1,128], index: 4, kind: input, shape index: {}]
  %s5 = inlined_call_operand.vmem [shape: f32[16,128], index: 5, kind: output, shape index: {}]
  %s6 = sld [smem:[#allocation0]]
  $region34: #{discriminator_forward.1} parent=0
    _
  %s8 = ssub.s32 1, %s6
  %s9 = scalar_select 0, %s8, %s6
  $region1: #{discriminator_forward.1} parent=0
    #allocation2 [shape = 'u8[65536]{0}', space=vmem, size = 0x10000, scoped, tag = 'input window, operand 3, single buffered']
    #allocation3 [shape = 's32[1]{0}', space=sflag, size = 0x4, scoped, tag = 'scoped memory for discriminator_forward.1']
    %10 = vsyncpa [#allocation3], 0
    // Predicated region
    $region2: #{discriminator_forward.1} parent=1 // pred_check
      _
    $region3: #{discriminator_forward.1} parent=1 // pred_check_branch
      %12 = sbr.rel (0) target = $region5
    $region4: #{discriminator_forward.1} parent=1 // pred_region
      _
    $region5: #{discriminator_forward.1} parent=1 // pred_fallthru
      _
    // Predicated region
    $region6: #{discriminator_forward.1} parent=1 // pred_check
      _
    $region7: #{discriminator_forward.1} parent=1 // pred_check_branch
      %14 = sbr.rel (0) target = $region9
    $region8: #{discriminator_forward.1} parent=1 // pred_region
      _
    $region9: #{discriminator_forward.1} parent=1 // pred_fallthru
      _
    // Predicated region
    $region10: #{discriminator_forward.1} parent=1 // pred_check
      _
    $region11: #{discriminator_forward.1} parent=1 // pred_check_branch
      %16 = sbr.rel (0) target = $region13
    $region12: #{discriminator_forward.1} parent=1 // pred_region
      _
    $region13: #{discriminator_forward.1} parent=1 // pred_fallthru
      _
    // Predicated region
    $region14: #{discriminator_forward.1} parent=1 // pred_check
      _
    $region15: #{discriminator_forward.1} parent=1 // pred_check_branch
      %18 = sbr.rel (0) target = $region17
    $region16: #{discriminator_forward.1} parent=1 // pred_region
      %s20 = ssub.s32 2048, 2048
      %21 = vsyncadd [#allocation3], %s20
      %s22 = sshll.u32 [#allocation2], 4
      %s23 = int_to_ptr.vmem [resolvable:$true] %s22
      %28 = dma.hbm_to_vmem [thread:$0]  %s3, 2048, %s23, [#allocation3], 128, 128, 8
    $region17: #{discriminator_forward.1} parent=1 // pred_fallthru
      _
    // Predicated region
    $region18: #{discriminator_forward.1} parent=1 // pred_check
      _
    $region19: #{discriminator_forward.1} parent=1 // pred_check_branch
      %30 = sbr.rel (0) target = $region21
    $region20: #{discriminator_forward.1} parent=1 // pred_region
      _
    $region21: #{discriminator_forward.1} parent=1 // pred_fallthru
      _
    // Predicated region
    $region22: #{discriminator_forward.1} parent=1 // pred_check
      _
    $region23: #{discriminator_forward.1} parent=1 // pred_check_branch
      %32 = sbr.rel (0) target = $region25
    $region24: #{discriminator_forward.1} parent=1 // pred_region
      %33 = dma.done [#allocation3], 2048
    $region25: #{discriminator_forward.1} parent=1 // pred_fallthru
      _
    %v34 = vld [vmem:[%s0] sm:$0xff]
    %v35 = vld [vmem:[%s0 + $0x8] sm:$0xff]
    %v36 = vld [vmem:[%s1] sm:$0xff]
    %v37 = vld [vmem:[%s1 + $0x8] sm:$0xff]
    %v38 = vld [vmem:[%s1 + $0x10] sm:$0xff]
    %v39 = vld [vmem:[%s1 + $0x18] sm:$0xff]
    %v40 = vld [vmem:[%s2] sm:$0x1]
    %v42 = vlaneseq
    %v43 = vshrl.u32 %v42, 7
    %v44 = vsub.s32 0, %v43
    %v45 = vrot.slane %v40, %v44
    %vm47 = vcmask 261120
    %v49 = vsel %vm47, %v34, 0
    %v52 = vsel %vm47, %v35, 0
    %54 = vmatprep.subr.mxu0 0.0
    %55 = vmatpush1.msra.mxu0 %v36
    %56 = vmatprep.subr.mxu0 0.0
    %57 = vmatpush1.msra.mxu0 %v37
    %58 = vmatprep.subr.mxu0 0.0
    %59 = vmatpush1.msra.mxu0 %v38
    %60 = vmatprep.subr.mxu0 0.0
    %61 = vmatpush1.msra.mxu0 %v39
    %62 = vmatprep.subr.mxu0 0.0
    %63 = vmatpush1.msra.mxu0 0.0
    %64 = vmatprep.subr.mxu0 0.0
    %65 = vmatpush1.msra.mxu0 0.0
    %66 = vmatprep.subr.mxu0 0.0
    %67 = vmatpush1.msra.mxu0 0.0
    %68 = vmatprep.subr.mxu0 0.0
    %69 = vmatpush1.msra.mxu0 0.0
    %70 = vmatprep.subr.mxu0 0.0
    %71 = vmatpush1.msra.mxu0 0.0
    %72 = vmatprep.subr.mxu0 0.0
    %73 = vmatpush1.msra.mxu0 0.0
    %74 = vmatprep.subr.mxu0 0.0
    %75 = vmatpush1.msra.mxu0 0.0
    %76 = vmatprep.subr.mxu0 0.0
    %77 = vmatpush1.msra.mxu0 0.0
    %78 = vmatprep.subr.mxu0 0.0
    %79 = vmatpush1.msra.mxu0 0.0
    %80 = vmatprep.subr.mxu0 0.0
    %81 = vmatpush1.msra.mxu0 0.0
    %82 = vmatprep.subr.mxu0 0.0
    %83 = vmatpush1.msra.mxu0 0.0
    %84 = vmatprep.subr.mxu0 0.0
    %85 = vmatpush1.msra.mxu0 0.0
    %86 = vmatprep.subr.mxu0 0.0
    %87 = vmatpush1.msra.mxu0 0.0
    %88 = vmatprep.subr.mxu0 0.0
    %89 = vmatpush1.msra.mxu0 0.0
    %90 = vmatprep.subr.mxu0 0.0
    %91 = vmatpush1.msra.mxu0 0.0
    %92 = vmatprep.subr.mxu0 0.0
    %93 = vmatpush1.msra.mxu0 0.0
    %94 = vmatprep.subr.mxu0 0.0
    %95 = vmatpush1.msra.mxu0 0.0
    %96 = vmatprep.subr.mxu0 0.0
    %97 = vmatpush1.msra.mxu0 0.0
    %98 = vmatprep.subr.mxu0 0.0
    %99 = vmatpush1.msra.mxu0 0.0
    %100 = vmatprep.subr.mxu0 0.0
    %101 = vmatpush1.msra.mxu0 0.0
    %102 = vmatprep.subr.mxu0 0.0
    %103 = vmatpush1.msra.mxu0 0.0
    %104 = vmatprep.subr.mxu0 0.0
    %105 = vmatpush1.msra.mxu0 0.0
    %106 = vmatprep.subr.mxu0 0.0
    %107 = vmatpush1.msra.mxu0 0.0
    %108 = vmatprep.subr.mxu0 0.0
    %109 = vmatpush1.msra.mxu0 0.0
    %110 = vmatprep.subr.mxu0 0.0
    %111 = vmatpush1.msra.mxu0 0.0
    %112 = vmatprep.subr.mxu0 0.0
    %113 = vmatpush1.msra.mxu0 0.0
    %114 = vmatprep.subr.mxu0 0.0
    %115 = vmatpush1.msra.mxu0 0.0
    %116 = vmatprep.subr.mxu0 0.0
    %117 = vmatpush1.msra.mxu0 0.0
    %118 = vmatprep.mubr.f32.mxu0 0.0
    %119 = vmatmul.mubr.f32.gmra.mrb[0].mxu0 %v49
    %v120 = vpop.f32.mrb[0].mxu0
    %v121 = vadd.f32 %v45, %v120
    %v122 = vpop.f32.mrb[0].mxu0
    %123 = vmatprep.mubr.f32.mxu0 0.0
    %124 = vmatmul.mubr.f32.gmra.mrb[0].mxu0 %v52
    %v125 = vpop.f32.mrb[0].mxu0
    %v126 = vadd.f32 %v45, %v125
    %v127 = vpop.f32.mrb[0].mxu0
    %128 = vdwg.mxu0
    %v129 = vtanh.pop %v121
    %v130 = vtanh.pop %v126
    %v131 = vld [vmem:[#allocation2] sm:$0xff]
    %v132 = vld [vmem:[#allocation2 + $0x8] sm:$0xff]
    %v133 = vld [vmem:[#allocation2 + $0x10] sm:$0xff]
    %v134 = vld [vmem:[#allocation2 + $0x18] sm:$0xff]
    %v135 = vld [vmem:[#allocation2 + $0x20] sm:$0xff]
    %v136 = vld [vmem:[#allocation2 + $0x28] sm:$0xff]
    %v137 = vld [vmem:[#allocation2 + $0x30] sm:$0xff]
    %v138 = vld [vmem:[#allocation2 + $0x38] sm:$0xff]
    %v139 = vld [vmem:[#allocation2 + $0x40] sm:$0xff]
    %v140 = vld [vmem:[#allocation2 + $0x48] sm:$0xff]
    %v141 = vld [vmem:[#allocation2 + $0x50] sm:$0xff]
    %v142 = vld [vmem:[#allocation2 + $0x58] sm:$0xff]
    %v143 = vld [vmem:[#allocation2 + $0x60] sm:$0xff]
    %v144 = vld [vmem:[#allocation2 + $0x68] sm:$0xff]
    %v145 = vld [vmem:[#allocation2 + $0x70] sm:$0xff]
    %v146 = vld [vmem:[#allocation2 + $0x78] sm:$0xff]
    %v147 = vld [vmem:[%s4] sm:$0x1]
    %v149 = vlaneseq
    %v150 = vshrl.u32 %v149, 7
    %v151 = vsub.s32 0, %v150
    %v152 = vrot.slane %v147, %v151
    %154 = vmatprep.subr.mxu0 0.0
    %155 = vmatpush1.msra.mxu0 %v131
    %156 = vmatprep.subr.mxu0 0.0
    %157 = vmatpush1.msra.mxu0 %v132
    %158 = vmatprep.subr.mxu0 0.0
    %159 = vmatpush1.msra.mxu0 %v133
    %160 = vmatprep.subr.mxu0 0.0
    %161 = vmatpush1.msra.mxu0 %v134
    %162 = vmatprep.subr.mxu0 0.0
    %163 = vmatpush1.msra.mxu0 %v135
    %164 = vmatprep.subr.mxu0 0.0
    %165 = vmatpush1.msra.mxu0 %v136
    %166 = vmatprep.subr.mxu0 0.0
    %167 = vmatpush1.msra.mxu0 %v137
    %168 = vmatprep.subr.mxu0 0.0
    %169 = vmatpush1.msra.mxu0 %v138
    %170 = vmatprep.subr.mxu0 0.0
    %171 = vmatpush1.msra.mxu0 %v139
    %172 = vmatprep.subr.mxu0 0.0
    %173 = vmatpush1.msra.mxu0 %v140
    %174 = vmatprep.subr.mxu0 0.0
    %175 = vmatpush1.msra.mxu0 %v141
    %176 = vmatprep.subr.mxu0 0.0
    %177 = vmatpush1.msra.mxu0 %v142
    %178 = vmatprep.subr.mxu0 0.0
    %179 = vmatpush1.msra.mxu0 %v143
    %180 = vmatprep.subr.mxu0 0.0
    %181 = vmatpush1.msra.mxu0 %v144
    %182 = vmatprep.subr.mxu0 0.0
    %183 = vmatpush1.msra.mxu0 %v145
    %184 = vmatprep.subr.mxu0 0.0
    %185 = vmatpush1.msra.mxu0 %v146
    %186 = vmatprep.subr.mxu0 0.0
    %187 = vmatpush1.msra.mxu0 0.0
    %188 = vmatprep.subr.mxu0 0.0
    %189 = vmatpush1.msra.mxu0 0.0
    %190 = vmatprep.subr.mxu0 0.0
    %191 = vmatpush1.msra.mxu0 0.0
    %192 = vmatprep.subr.mxu0 0.0
    %193 = vmatpush1.msra.mxu0 0.0
    %194 = vmatprep.subr.mxu0 0.0
    %195 = vmatpush1.msra.mxu0 0.0
    %196 = vmatprep.subr.mxu0 0.0
    %197 = vmatpush1.msra.mxu0 0.0
    %198 = vmatprep.subr.mxu0 0.0
    %199 = vmatpush1.msra.mxu0 0.0
    %200 = vmatprep.subr.mxu0 0.0
    %201 = vmatpush1.msra.mxu0 0.0
    %202 = vmatprep.subr.mxu0 0.0
    %203 = vmatpush1.msra.mxu0 0.0
    %204 = vmatprep.subr.mxu0 0.0
    %205 = vmatpush1.msra.mxu0 0.0
    %206 = vmatprep.subr.mxu0 0.0
    %207 = vmatpush1.msra.mxu0 0.0
    %208 = vmatprep.subr.mxu0 0.0
    %209 = vmatpush1.msra.mxu0 0.0
    %210 = vmatprep.subr.mxu0 0.0
    %211 = vmatpush1.msra.mxu0 0.0
    %212 = vmatprep.subr.mxu0 0.0
    %213 = vmatpush1.msra.mxu0 0.0
    %214 = vmatprep.subr.mxu0 0.0
    %215 = vmatpush1.msra.mxu0 0.0
    %216 = vmatprep.subr.mxu0 0.0
    %217 = vmatpush1.msra.mxu0 0.0
    %218 = vmatprep.mubr.f32.mxu0 0.0
    %219 = vmatmul.mubr.f32.gmra.mrb[0].mxu0 %v129
    %v220 = vpop.f32.mrb[0].mxu0
    %v221 = vadd.f32 %v152, %v220
    %v222 = vpop.f32.mrb[0].mxu0
    %223 = vmatprep.mubr.f32.mxu0 0.0
    %224 = vmatmul.mubr.f32.gmra.mrb[0].mxu0 %v130
    %v225 = vpop.f32.mrb[0].mxu0
    %v226 = vadd.f32 %v152, %v225
    %v227 = vpop.f32.mrb[0].mxu0
    %228 = vdwg.mxu0
    %229 = vst [vmem:[%s5] sm:$0xff] %v221
    %230 = vst [vmem:[%s5 + $0x8] sm:$0xff] %v226
    // Predicated region
    $region26: #{discriminator_forward.1} parent=1 // pred_check
      _
    $region27: #{discriminator_forward.1} parent=1 // pred_check_branch
      %232 = sbr.rel (0) target = $region29
    $region28: #{discriminator_forward.1} parent=1 // pred_region
      _
    $region29: #{discriminator_forward.1} parent=1 // pred_fallthru
      _
    // Predicated region
    $region30: #{discriminator_forward.1} parent=1 // pred_check
      _
    $region31: #{discriminator_forward.1} parent=1 // pred_check_branch
      %234 = sbr.rel (0) target = $region33
    $region32: #{discriminator_forward.1} parent=1 // pred_region
      _
    $region33: #{discriminator_forward.1} parent=1 // pred_fallthru
      _
    %235 = vsyncpa [#allocation3], 1

</llo_original>
